<compile_context>
chip_gen: v6e
topology: v6e:2x2x1
jax: 0.10.0
libtpu: 0.0.40
codegen_flags: <defaults>
</compile_context>

<pallas_src>
import math

import jax
import jax.numpy as jnp
from jax import lax
from jax.experimental import pallas as pl
from jax.experimental.pallas import tpu as pltpu

_X_BLOCK_TARGET_BYTES = 8 * 1024 * 1024  # per-block x footprint target


# ----------------------------- Pallas kernel ------------------------------ #
def rope_kernel(x_ref, cos_ref, sin_ref, o_ref):
    # x_ref / o_ref: (TB, TS, Dl) blocks (interleaved pairs along the lane dim)
    # cos_ref / sin_ref: (TS, Dl) table blocks (broadcast over the batch tile)
    x = x_ref[...].astype(jnp.float32)
    c = cos_ref[...].astype(jnp.float32)
    s = sin_ref[...].astype(jnp.float32)   # -sin on even lanes, +sin on odd lanes
    dl = x.shape[-1]
    # pltpu.roll matches jnp.roll: out[i] = x[(i - shift) % dl] along `axis`.
    x_next = pltpu.roll(x, dl - 1, 2)      # x[..., (i + 1) % dl]
    x_prev = pltpu.roll(x, 1, 2)           # x[..., (i - 1) % dl]
    lane = lax.broadcasted_iota(jnp.int32, (1, dl), 1)
    odd = (lane & 1) == 1                  # broadcasts over (TB, TS, dl)
    # Even lane 2d uses x[2d+1]; odd lane 2d+1 uses x[2d]: the roll wrap terms
    # at lanes 0 / dl-1 are never selected, so no fold/wrap correction needed.
    x_swap = jnp.where(odd, x_prev, x_next)
    o_ref[...] = (x * c + x_swap * s).astype(o_ref.dtype)


# ------------------------------ cache setup -------------------------------- #
def make_rope_cache(theta: float, d_k: int, max_seq_len: int, dtype=jnp.float32):
    """Build width-d_k duplicated-cos and parity-signed-sin tables."""
    pos = jnp.arange(max_seq_len, dtype=jnp.float32)
    inv_freq = 1.0 / jnp.power(
        jnp.float32(theta), jnp.arange(0, d_k, 2, dtype=jnp.float32) / d_k
    )  # (d_k//2,)
    ang = pos[:, None] * inv_freq[None, :]                 # (L, d_k//2)
    cos = jnp.cos(ang)
    sin = jnp.sin(ang)
    cos_dup = jnp.repeat(cos, 2, axis=-1).astype(dtype)                      # (L, d_k)
    sin_signed = jnp.stack([-sin, sin], axis=-1).reshape(max_seq_len, d_k)   # (L, d_k)
    return cos_dup, sin_signed.astype(dtype)


# ------------------------------ tiling helpers ------------------------------ #
def _vmem_capacity_bytes() -> int:
    try:
        cap = getattr(pltpu.get_tpu_info(), "vmem_capacity_bytes", None)
        if cap:
            return int(cap)
    except Exception:
        pass
    return 128 * 1024 * 1024  # conservative v5e/v6e default


def _pick_seq_tile(seq_rows: int, max_rows: int, sublane: int) -> int:
    """Full S_rows, or a sublane-aligned tile <= the VMEM-derived row budget."""
    if seq_rows <= max_rows:
        return seq_rows
    cap = max(sublane, (min(seq_rows, max_rows) // sublane) * sublane)
    for d in range(cap, sublane - 1, -sublane):   # prefer an exact divisor
        if seq_rows % d == 0:
            return d
    return cap  # ragged last block; grid uses pl.cdiv


def _pick_batch_tile(batch: int, max_tiles: int) -> int:
    for d in range(max(1, min(batch, max_tiles)), 0, -1):
        if batch % d == 0:
            return d
    return 1


# ------------------------------ module glue -------------------------------- #
def rope_forward(x, token_positions, cos_dup, sin_signed, d_k: int):
    """Apply RoPE. x: [..., S, d_k] (interleaved pairs); token_positions: [S]."""
    # Mirror torch's token_positions.squeeze(0).
    if token_positions.ndim > 1 and token_positions.shape[0] == 1:
        token_positions = jnp.squeeze(token_positions, axis=0)
    assert token_positions.ndim == 1, "token_positions must be a 1-D [S] vector"

    orig_shape = x.shape
    *batch_dims, S, Dk = x.shape
    assert Dk == d_k and d_k % 2 == 0
    assert token_positions.shape[0] == S
    B = math.prod(batch_dims) if batch_dims else 1

    # Gather the pre-expanded tables for the requested positions (tiny glue).
    # TODO(synk): for contiguous token_positions a scalar-prefetched start
    # offset into the full tables (PrefetchScalarGridSpec) would remove this
    # extra gather pass; kept jnp.take for fully general position vectors.
    cos_g = jnp.take(cos_dup, token_positions, axis=0)       # (S, Dk)
    sin_g = jnp.take(sin_signed, token_positions, axis=0)    # (S, Dk)

    # d_k < 128: fold consecutive positions into the lane dim -> lane-dense
    # blocks of width 128 (unmasked stores).  Math is unchanged because the
    # pair swap never crosses a pair boundary.
    fold = 1
    if Dk < 128 and 128 % Dk == 0 and S % (128 // Dk) == 0:
        fold = 128 // Dk
    S_rows, Dl = S // fold, Dk * fold

    x3 = x.reshape(B, S_rows, Dl)            # native dtype, still interleaved
    cos_g = cos_g.reshape(S_rows, Dl)
    sin_g = sin_g.reshape(S_rows, Dl)

    # ------------- generation-aware tile sizing & VMEM limit --------------- #
    itemsize = jnp.dtype(x.dtype).itemsize
    tab_itemsize = jnp.dtype(cos_g.dtype).itemsize
    vmem_cap = _vmem_capacity_bytes()
    vmem_limit = (vmem_cap * 3) // 4          # ~96 MiB on v5e/v6e, ~48 MiB on v7x
    sublane = max(8, 32 // itemsize)          # 8 f32 / 16 bf16 / 32 int8
    # Double-buffered per-row footprint: x in + x out + cos + sin.
    per_row_bytes = Dl * 2 * (2 * itemsize + 2 * tab_itemsize)
    max_rows_vmem = max(sublane, int(vmem_limit * 0.85) // per_row_bytes)
    max_rows_tgt = max(sublane, _X_BLOCK_TARGET_BYTES // (Dl * itemsize))
    max_rows = min(max_rows_vmem, max_rows_tgt)

    TS = _pick_seq_tile(S_rows, max_rows, sublane)
    TB = _pick_batch_tile(B, max(1, max_rows // TS))
    # Batch-tile axis innermost -> table blocks stay resident across it.
    grid = (pl.cdiv(S_rows, TS), pl.cdiv(B, TB))

    cost = pl.CostEstimate(
        flops=4 * B * S * Dk,
        transcendentals=0,
        bytes_accessed=2 * B * S * Dk * itemsize + 2 * S * Dk * tab_itemsize,
    )

    out3 = pl.pallas_call(
        rope_kernel,
        out_shape=jax.ShapeDtypeStruct((B, S_rows, Dl), x.dtype),
        grid_spec=pltpu.PrefetchScalarGridSpec(
            num_scalar_prefetch=0,
            grid=grid,
            in_specs=[
                pl.BlockSpec((TB, TS, Dl), lambda s, b: (b, s, 0)),  # x
                pl.BlockSpec((TS, Dl), lambda s, b: (s, 0)),         # cos_dup
                pl.BlockSpec((TS, Dl), lambda s, b: (s, 0)),         # sin_signed
            ],
            out_specs=pl.BlockSpec((TB, TS, Dl), lambda s, b: (b, s, 0)),
        ),
        compiler_params=pltpu.CompilerParams(
            dimension_semantics=("parallel", "parallel"),
            vmem_limit_bytes=int(vmem_limit),
        ),
        cost_estimate=cost,
    )(x3, cos_g, sin_g)

    return out3.reshape(orig_shape)


# ------------------------------ reference ---------------------------------- #
def rope_reference(x, token_positions, theta: float, d_k: int):
    Dh = d_k // 2
    pos = token_positions.astype(jnp.float32)
    inv_freq = 1.0 / jnp.power(
        jnp.float32(theta), jnp.arange(0, d_k, 2, dtype=jnp.float32) / d_k
    )
    ang = pos[:, None] * inv_freq[None, :]  # (S, Dh)
    c, s = jnp.cos(ang), jnp.sin(ang)
    x4 = x.astype(jnp.float32).reshape(*x.shape[:-1], Dh, 2)
    xe, xo = x4[..., 0], x4[..., 1]
    oe = xe * c - xo * s
    oo = xo * c + xe * s
    return jnp.stack((oe, oo), axis=-1).reshape(x.shape).astype(x.dtype)


if __name__ == "__main__":
    theta = 10000.0
    max_seq_len = 64
    key = jax.random.PRNGKey(0)
    kx1, kx2, kp = jax.random.split(key, 3)

    # Case 1: d_k = 128 (lane-dense head dim), arbitrary positions.
    d_k = 128
    B, S = 2, 8
    x = jax.random.normal(kx1, (B, S, d_k), dtype=jnp.float32)
    token_positions = jax.random.permutation(kp, max_seq_len)[:S].astype(jnp.int32)
    cos_dup, sin_signed = make_rope_cache(theta, d_k, max_seq_len)
    out = jax.block_until_ready(
        rope_forward(x, token_positions, cos_dup, sin_signed, d_k)
    )
    ref = rope_reference(x, token_positions, theta, d_k)
    assert out.shape == x.shape and out.dtype == x.dtype
    assert jnp.allclose(out, ref, atol=1e-5, rtol=1e-5), "d_k=128 mismatch"

    # Case 2: d_k = 64 (exercises the lane-folding path), extra batch dims.
    d_k2 = 64
    x2 = jax.random.normal(kx2, (2, 3, S, d_k2), dtype=jnp.float32)
    cos_dup2, sin_signed2 = make_rope_cache(theta, d_k2, max_seq_len)
    out2 = jax.block_until_ready(
        rope_forward(x2, token_positions, cos_dup2, sin_signed2, d_k2)
    )
    ref2 = rope_reference(x2, token_positions, theta, d_k2)
    assert out2.shape == x2.shape and out2.dtype == x2.dtype
    assert jnp.allclose(out2, ref2, atol=1e-5, rtol=1e-5), "d_k=64 mismatch"

    print("KERNEL_OK")
</pallas_src>

<mosaic_0001>
module attributes {stable_mosaic.version = 11 : i64} {
  func.func @rope_kernel(%arg0: i32, %arg1: i32, %arg2: memref<2x8x128xf32, #tpu.memory_space<vmem>>, %arg3: memref<8x128xf32, #tpu.memory_space<vmem>>, %arg4: memref<8x128xf32, #tpu.memory_space<vmem>>, %arg5: memref<2x8x128xf32, #tpu.memory_space<vmem>>) attributes {dimension_semantics = [#tpu.dimension_semantics<parallel>, #tpu.dimension_semantics<parallel>], iteration_bounds = array<i64: 1, 1>, scalar_prefetch = 0 : i64, scratch_operands = 0 : i64, tpu.core_type = #tpu.core_type<tc>, window_params = [{transform_indices = @transform_0, window_bounds = array<i64: 2, 8, 128>}, {transform_indices = @transform_1, window_bounds = array<i64: 8, 128>}, {transform_indices = @transform_2, window_bounds = array<i64: 8, 128>}, {transform_indices = @transform_3, window_bounds = array<i64: 2, 8, 128>}]} {
    %c0 = arith.constant 0 : index
    %c0_0 = arith.constant 0 : index
    %c0_1 = arith.constant 0 : index
    %0 = vector.load %arg2[%c0, %c0_0, %c0_1] : memref<2x8x128xf32, #tpu.memory_space<vmem>>, vector<2x8x128xf32>
    %c0_2 = arith.constant 0 : index
    %c0_3 = arith.constant 0 : index
    %1 = vector.load %arg3[%c0_2, %c0_3] : memref<8x128xf32, #tpu.memory_space<vmem>>, vector<8x128xf32>
    %c0_4 = arith.constant 0 : index
    %c0_5 = arith.constant 0 : index
    %2 = vector.load %arg4[%c0_4, %c0_5] : memref<8x128xf32, #tpu.memory_space<vmem>>, vector<8x128xf32>
    %c127_i32 = arith.constant 127 : i32
    %3 = tpu.dynamic_rotate %0 by %c127_i32 dim 2 : vector<2x8x128xf32>, i32 -> vector<2x8x128xf32>
    %c1_i32 = arith.constant 1 : i32
    %4 = tpu.dynamic_rotate %0 by %c1_i32 dim 2 : vector<2x8x128xf32>, i32 -> vector<2x8x128xf32>
    %5 = tpu.iota {dimensions = array<i32: 1>} : vector<1x128xi32>
    %c1_i32_6 = arith.constant 1 : i32
    %6 = vector.broadcast %c1_i32_6 : i32 to vector<1x128xi32>
    %7 = arith.andi %5, %6 : vector<1x128xi32>
    %c1_i32_7 = arith.constant 1 : i32
    %8 = vector.broadcast %c1_i32_7 : i32 to vector<1x128xi32>
    %9 = arith.cmpi eq, %7, %8 : vector<1x128xi32>
    %10 = vector.shape_cast %9 : vector<1x128xi1> to vector<1x1x128xi1>
    %11 = vector.broadcast %10 : vector<1x1x128xi1> to vector<2x8x128xi1>
    %12 = arith.select %11, %4, %3 : vector<2x8x128xi1>, vector<2x8x128xf32>
    %13 = vector.shape_cast %1 : vector<8x128xf32> to vector<1x8x128xf32>
    %14 = vector.broadcast %13 : vector<1x8x128xf32> to vector<2x8x128xf32>
    %15 = arith.mulf %0, %14 : vector<2x8x128xf32>
    %16 = vector.shape_cast %2 : vector<8x128xf32> to vector<1x8x128xf32>
    %17 = vector.broadcast %16 : vector<1x8x128xf32> to vector<2x8x128xf32>
    %18 = arith.mulf %12, %17 : vector<2x8x128xf32>
    %19 = arith.addf %15, %18 : vector<2x8x128xf32>
    %c0_8 = arith.constant 0 : index
    %c0_9 = arith.constant 0 : index
    %c0_10 = arith.constant 0 : index
    %20 = vector.load %arg5[%c0_8, %c0_9, %c0_10] : memref<2x8x128xf32, #tpu.memory_space<vmem>>, vector<2x8x128xf32>
    tpu.vector_store %arg5[%c0_8, %c0_9, %c0_10], %19 {strides = array<i32>} : memref<2x8x128xf32, #tpu.memory_space<vmem>>, vector<2x8x128xf32>,
    return
  }
  func.func @transform_0(%arg0: i32, %arg1: i32) -> (i32, i32, i32) {
    %c0_i32 = arith.constant 0 : i32
    %c0_i32_0 = arith.constant 0 : i32
    return %arg1, %arg0, %c0_i32 : i32, i32, i32
  }
  func.func @transform_1(%arg0: i32, %arg1: i32) -> (i32, i32) {
    %c0_i32 = arith.constant 0 : i32
    %c0_i32_0 = arith.constant 0 : i32
    return %arg0, %c0_i32 : i32, i32
  }
  func.func @transform_2(%arg0: i32, %arg1: i32) -> (i32, i32) {
    %c0_i32 = arith.constant 0 : i32
    %c0_i32_0 = arith.constant 0 : i32
    return %arg0, %c0_i32 : i32, i32
  }
  func.func @transform_3(%arg0: i32, %arg1: i32) -> (i32, i32, i32) {
    %c0_i32 = arith.constant 0 : i32
    %c0_i32_0 = arith.constant 0 : i32
    return %arg1, %arg0, %c0_i32 : i32, i32, i32
  }
}

</mosaic_0001>

<llo_original>
// kernel: tpu_custom_call.1
$region0: #{tpu_custom_call.1}
  #allocation0 [shape = 'u32[]', space=smem, size = 0x4, offset = 0x4, fixed_abs, tag = 'smem constant byte address 0x4 - core index']
  #allocation1 [shape = 'u32[144,128]{1,0:T(1,128)}', space=vmem, size = 0x12000, scoped, tag = 'internal scratch']
  %s0 = inlined_call_operand.hbm [shape: f32[2,8,128], index: 0, kind: input, shape index: {}]
  %s1 = inlined_call_operand.hbm [shape: f32[8,128], index: 1, kind: input, shape index: {}]
  %s2 = inlined_call_operand.hbm [shape: f32[8,128], index: 2, kind: input, shape index: {}]
  %s3 = inlined_call_operand.hbm [shape: f32[2,8,128], index: 3, kind: output, shape index: {}]
  %s4 = sld [smem:[#allocation0]]
  $region34: #{tpu_custom_call.1} parent=0
    _
  %s6 = ssub.s32 1, %s4
  %s7 = scalar_select 0, %s6, %s4
  $region1: #{tpu_custom_call.1} parent=0
    #allocation2 [shape = 'u8[8192]{0}', space=vmem, size = 0x2000, scoped, tag = 'input window, operand 0, single buffered']
    #allocation3 [shape = 's32[1]{0}', space=sflag, size = 0x4, scoped, tag = 'scoped memory for tpu_custom_call.1']
    #allocation4 [shape = 's32[1]{0}', space=sflag, size = 0x4, scoped, tag = 'scoped memory for tpu_custom_call.1']
    #allocation5 [shape = 'u8[4096]{0}', space=vmem, size = 0x1000, scoped, tag = 'input window, operand 1, single buffered']
    #allocation6 [shape = 's32[1]{0}', space=sflag, size = 0x4, scoped, tag = 'scoped memory for tpu_custom_call.1']
    #allocation7 [shape = 'u8[4096]{0}', space=vmem, size = 0x1000, scoped, tag = 'input window, operand 2, single buffered']
    #allocation8 [shape = 'u8[8192]{0}', space=vmem, size = 0x2000, scoped, tag = 'output window, operand 0, single buffered']
    %8 = vsyncpa [#allocation3], 0
    %9 = vsyncpa [#allocation6], 0
    %10 = vsyncpa [#allocation4], 0
    // Predicated region
    $region2: #{tpu_custom_call.1} parent=1 // pred_check
      _
    $region3: #{tpu_custom_call.1} parent=1 // pred_check_branch
      %12 = sbr.rel (0) target = $region5
    $region4: #{tpu_custom_call.1} parent=1 // pred_region
      %s14 = ssub.s32 256, 256
      %15 = vsyncadd [#allocation3], %s14
      %s16 = sshll.u32 [#allocation2], 4
      %s17 = int_to_ptr.vmem [resolvable:$true] %s16
      %22 = dma.hbm_to_vmem [thread:$0]  %s0, 256, %s17, [#allocation3], 128, 128, 8
    $region5: #{tpu_custom_call.1} parent=1 // pred_fallthru
      _
    // Predicated region
    $region6: #{tpu_custom_call.1} parent=1 // pred_check
      _
    $region7: #{tpu_custom_call.1} parent=1 // pred_check_branch
      %24 = sbr.rel (0) target = $region9
    $region8: #{tpu_custom_call.1} parent=1 // pred_region
      %s26 = ssub.s32 128, 128
      %27 = vsyncadd [#allocation6], %s26
      %s29 = sshll.u32 [#allocation5], 4
      %s30 = int_to_ptr.vmem [resolvable:$true] %s29
      %32 = dma.hbm_to_vmem [thread:$0]  %s1, 128, %s30, [#allocation6]
    $region9: #{tpu_custom_call.1} parent=1 // pred_fallthru
      _
    // Predicated region
    $region10: #{tpu_custom_call.1} parent=1 // pred_check
      _
    $region11: #{tpu_custom_call.1} parent=1 // pred_check_branch
      %34 = sbr.rel (0) target = $region13
    $region12: #{tpu_custom_call.1} parent=1 // pred_region
      %s36 = ssub.s32 128, 128
      %37 = vsyncadd [#allocation6], %s36
      %s39 = sshll.u32 [#allocation7], 4
      %s40 = int_to_ptr.vmem [resolvable:$true] %s39
      %42 = dma.hbm_to_vmem [thread:$0]  %s2, 128, %s40, [#allocation6]
    $region13: #{tpu_custom_call.1} parent=1 // pred_fallthru
      _
    // Predicated region
    $region14: #{tpu_custom_call.1} parent=1 // pred_check
      _
    $region15: #{tpu_custom_call.1} parent=1 // pred_check_branch
      %44 = sbr.rel (0) target = $region17
    $region16: #{tpu_custom_call.1} parent=1 // pred_region
      %45 = dma.done [#allocation3], 256
    $region17: #{tpu_custom_call.1} parent=1 // pred_fallthru
      _
    // Predicated region
    $region18: #{tpu_custom_call.1} parent=1 // pred_check
      _
    $region19: #{tpu_custom_call.1} parent=1 // pred_check_branch
      %47 = sbr.rel (0) target = $region21
    $region20: #{tpu_custom_call.1} parent=1 // pred_region
      %48 = dma.done [#allocation6], 128
    $region21: #{tpu_custom_call.1} parent=1 // pred_fallthru
      _
    // Predicated region
    $region22: #{tpu_custom_call.1} parent=1 // pred_check
      _
    $region23: #{tpu_custom_call.1} parent=1 // pred_check_branch
      %50 = sbr.rel (0) target = $region25
    $region24: #{tpu_custom_call.1} parent=1 // pred_region
      %51 = dma.done [#allocation6], 128
    $region25: #{tpu_custom_call.1} parent=1 // pred_fallthru
      _
    %v52 = vld [vmem:[#allocation2] sm:$0xff]
    %v53 = vld [vmem:[#allocation2 + $0x8] sm:$0xff]
    %v54 = vld [vmem:[#allocation5] sm:$0xff]
    %v55 = vld [vmem:[#allocation7] sm:$0xff]
    %56 = vrot.lane.b32.xlu0 %v52, 127
    %v57 = vpop.permute.xlu0 %56
    %58 = vrot.lane.b32.xlu0 %v53, 127
    %v59 = vpop.permute.xlu0 %58
    %60 = vrot.lane.b32.xlu0 %v52, 1
    %v61 = vpop.permute.xlu0 %60
    %62 = vrot.lane.b32.xlu0 %v53, 1
    %v63 = vpop.permute.xlu0 %62
    %v64 = vlaneseq
    %v65 = vand.u32 %v64, 127
    %v66 = vand.u32 %v65, 1
    %vm67 = vcmp.eq.s32.totalorder %v66, 1
    %v68 = vsel %vm67, 1, 0
    %vm69 = vcmp.eq.s32.totalorder %v68, 1
    %v70 = vsel %vm69, %v61, %v57
    %v71 = vsel %vm69, %v63, %v59
    %v72 = vmul.f32 %v52, %v54
    %v73 = vmul.f32 %v53, %v54
    %v74 = vmul.f32 %v70, %v55
    %v75 = vmul.f32 %v71, %v55
    %v76 = vadd.f32 %v72, %v74
    %v77 = vadd.f32 %v73, %v75
    %78 = vst [vmem:[#allocation8] sm:$0xff] %v76
    %79 = vst [vmem:[#allocation8 + $0x8] sm:$0xff] %v77
    // Predicated region
    $region26: #{tpu_custom_call.1} parent=1 // pred_check
      _
    $region27: #{tpu_custom_call.1} parent=1 // pred_check_branch
      %81 = sbr.rel (0) target = $region29
    $region28: #{tpu_custom_call.1} parent=1 // pred_region
      %s83 = ssub.s32 256, 256
      %84 = vsyncadd [#allocation4], %s83
      %s85 = sshll.u32 [#allocation8], 4
      %s86 = int_to_ptr.vmem [resolvable:$true] %s85
      %91 = dma.vmem_to_hbm [thread:$0]  %s86, 256, %s3, [#allocation4], 128, 128, 8
    $region29: #{tpu_custom_call.1} parent=1 // pred_fallthru
      _
    // Predicated region
    $region30: #{tpu_custom_call.1} parent=1 // pred_check
      _
    $region31: #{tpu_custom_call.1} parent=1 // pred_check_branch
      %93 = sbr.rel (0) target = $region33
    $region32: #{tpu_custom_call.1} parent=1 // pred_region
      %94 = dma.done [#allocation4], 256
    $region33: #{tpu_custom_call.1} parent=1 // pred_fallthru
      _
    %95 = vsyncpa [#allocation3], 1
    %96 = vsyncpa [#allocation6], 1
    %97 = vsyncpa [#allocation4], 1

</llo_original>
